<compile_context>
chip_gen: v7x
topology: tpu7x:2x2x1
jax: 0.10.0
libtpu: 0.0.40
codegen_flags: <defaults>
</compile_context>

<pallas_src>
import math

import jax
import jax.numpy as jnp
import numpy as np
from jax.experimental import pallas as pl
from jax.experimental.pallas import tpu as pltpu

_VMEM_TILE_BUDGET = 40 << 20   # working-set budget; conservative for v7x (64 MiB phys)
_VMEM_LIMIT_CAP = 48 << 20     # never request close to full physical VMEM


def _round_up(x, m):
    return ((x + m - 1) // m) * m


def _fused_logprob_kernel(x_ref, w_ref, out_ref):
    # x_ref:   (tb, D)       batch tile (resident across class tiles)
    # w_ref:   (2D+1, tc)    packed class params: [-0.5*inv_var.T; (mu*inv_var).T; bias]
    # out_ref: (tb, tc)      per-class summed log-probs
    x = x_ref[...].astype(jnp.float32)                           # (tb, D)
    ones = jnp.ones((x.shape[0], 1), jnp.float32)
    aug = jnp.concatenate([x * x, x, ones], axis=-1)             # (tb, 2D+1)
    out_ref[...] = jnp.dot(
        aug, w_ref[...],
        preferred_element_type=jnp.float32,
        precision=jax.lax.Precision.HIGHEST,                     # full f32 MXU passes
    ).astype(out_ref.dtype)


def pack_class_params(class_means, class_log_stds):
    """Fold all per-class preprocessing into one (2*D+1, C) weight matrix.

    logdet[b,c] = (x*x) @ (-0.5*inv_var).T + x @ (mu*inv_var).T + bias[c]
    Hoist this out of the per-step path (or keep it under the same jit) when
    the class parameters are constant within a training step.
    """
    mu = class_means.astype(jnp.float32)                         # (C, D)
    ls = class_log_stds.astype(jnp.float32)                      # (C, D)
    _, D = mu.shape
    inv_var = jnp.exp(-2.0 * ls)                                 # (C, D)
    bias = (-0.5 * jnp.sum(mu * mu * inv_var, axis=-1)
            - jnp.sum(ls, axis=-1)
            - 0.5 * D * math.log(2.0 * math.pi))                 # (C,)
    w_full = jnp.concatenate(
        [(-0.5 * inv_var).T, (mu * inv_var).T, bias[None, :]], axis=0)   # (2D+1, C)
    return w_full


def _weight_spec(K, tc, n_buffers):
    idx = lambda i, j: (0, j)
    if hasattr(pl, "Buffered"):
        try:
            return pl.BlockSpec((K, tc), idx,
                                pipeline_mode=pl.Buffered(n_buffers))
        except TypeError:
            pass
    return pl.BlockSpec((K, tc), idx)


def log_probs_per_class(x, class_means, class_log_stds, *,
                        tb=1024, tc=1024, out_dtype=jnp.float32,
                        packed_params=None):
    """Per-class Gaussian log-probs summed over dims: returns (B, C)."""
    B, D = x.shape
    if packed_params is None:
        packed_params = pack_class_params(class_means, class_log_stds)
    w_full = packed_params
    K, C = w_full.shape
    assert K == 2 * D + 1

    # ---- class tile: full extent for small C (no padded writeback), else 128-lane tiles
    if C <= 128:
        tc = C
    else:
        tc = int(min(tc, _round_up(C, 128)))
        tc = max(128, (tc // 128) * 128)
    nc = pl.cdiv(C, tc)
    w_bufs = 1 if nc == 1 else 2          # single-buffer the resident weights

    # ---- batch tile: multiple of 8 sublanes, clamped by the VMEM working-set budget
    tb = int(min(tb, _round_up(B, 8)))
    tb = max(8, (tb // 8) * 8)

    def tile_bytes(tb_):
        return 4 * (2 * tb_ * D            # x block, double-buffered
                    + 2 * tb_ * tc         # out block, double-buffered
                    + w_bufs * K * tc)     # packed class params

    while tb > 8 and tile_bytes(tb) > _VMEM_TILE_BUDGET:
        tb = max(8, (tb // 2 // 8) * 8)
    nb = pl.cdiv(B, tb)

    vmem_limit = int(min(_VMEM_LIMIT_CAP,
                         max(32 << 20, tile_bytes(tb) + (8 << 20))))

    return pl.pallas_call(
        _fused_logprob_kernel,
        out_shape=jax.ShapeDtypeStruct((B, C), out_dtype),
        grid_spec=pltpu.PrefetchScalarGridSpec(
            num_scalar_prefetch=0,
            grid=(nb, nc),
            in_specs=[
                pl.BlockSpec((tb, D), lambda i, j: (i, 0)),   # x: resident across class tiles
                _weight_spec(K, tc, w_bufs),                  # packed class params
            ],
            out_specs=pl.BlockSpec((tb, tc), lambda i, j: (i, j)),
        ),
        compiler_params=pltpu.CompilerParams(
            dimension_semantics=("parallel", "parallel"),     # megacore-friendly
            vmem_limit_bytes=vmem_limit,
        ),
    )(x, w_full)


def nclass_independent_dist_forward(x, class_means, class_log_stds, fixed=None):
    """Mirrors NClassIndependentDist.forward."""
    fixed = fixed or {}
    if not fixed.get('sum_dims', True):
        # Per-dim log-probs (B, C, D): pure broadcast elementwise (no reduction);
        # XLA fuses this fine — not a Pallas candidate.
        mu = class_means.astype(jnp.float32)
        ls = class_log_stds.astype(jnp.float32)
        normed = (x[:, None, :].astype(jnp.float32) - mu[None]) / jnp.exp(ls)[None]
        logdet = -0.5 * normed ** 2 - ls[None] - 0.5 * math.log(2.0 * math.pi)
    else:
        logdet = log_probs_per_class(x, class_means, class_log_stds)
    y = fixed.get('y', None)
    if y is not None:
        # glue: gather the selected class column per sample (plain JAX)
        if y.ndim > 1:
            y = jnp.argmax(y, axis=1, keepdims=True)
        else:
            y = y[:, None]
        logdet = jnp.take_along_axis(logdet, y, axis=1)[:, 0]    # (B,)
    return x, logdet


def _reference_log_probs(x, means, log_stds):
    x = np.asarray(x, np.float64)
    means = np.asarray(means, np.float64)
    log_stds = np.asarray(log_stds, np.float64)
    diff = x[:, None, :] - means[None, :, :]
    normed = diff / np.exp(log_stds)[None, :, :]
    log_p = -0.5 * normed ** 2 - log_stds[None, :, :] - 0.5 * np.log(2 * np.pi)
    return log_p.sum(axis=-1)


if __name__ == "__main__":
    B, C, D = 16, 4, 32   # batch, n_classes, n_dims
    key = jax.random.PRNGKey(0)
    kx, km, ks, ky = jax.random.split(key, 4)

    x = jax.random.normal(kx, (B, D), dtype=jnp.float32)
    # Deterministic synthetic parameters (module __init__ uses zeros; use small
    # random values so per-class outputs actually differ).
    class_means = 0.5 * jax.random.normal(km, (C, D), dtype=jnp.float32)
    class_log_stds = 0.1 * jax.random.normal(ks, (C, D), dtype=jnp.float32)

    # Default path: fixed=None -> (x, logdet) with logdet shape (B, C)
    x_out, logdet = nclass_independent_dist_forward(x, class_means, class_log_stds)
    jax.block_until_ready(logdet)

    ref = _reference_log_probs(x, class_means, class_log_stds)
    assert x_out.shape == (B, D) and logdet.shape == (B, C)
    np.testing.assert_allclose(np.asarray(logdet), ref, rtol=1e-3, atol=1e-3)

    # Labeled path: fixed={'y': labels} -> logdet shape (B,)
    y_lbl = jax.random.randint(ky, (B,), 0, C)
    _, logdet_y = nclass_independent_dist_forward(
        x, class_means, class_log_stds, fixed={'y': y_lbl})
    jax.block_until_ready(logdet_y)
    np.testing.assert_allclose(
        np.asarray(logdet_y), ref[np.arange(B), np.asarray(y_lbl)],
        rtol=1e-3, atol=1e-3)

    # Non-tile-divisible batch (ragged last block, no wrapper-side padding).
    Bo = 13
    xo = jax.random.normal(kx, (Bo, D), dtype=jnp.float32)
    _, logdet_o = nclass_independent_dist_forward(xo, class_means, class_log_stds)
    jax.block_until_ready(logdet_o)
    np.testing.assert_allclose(
        np.asarray(logdet_o), _reference_log_probs(xo, class_means, class_log_stds),
        rtol=1e-3, atol=1e-3)

    # TODO(synk): sampling paths (invert/get_samples/get_unlabeled_samples) are
    # RNG-driven module methods, not part of forward(); left to plain JAX.
    print("KERNEL_OK")
</pallas_src>

<mosaic_0001>
module attributes {stable_mosaic.version = 11 : i64} {
  func.func @_fused_logprob_kernel(%arg0: i32, %arg1: i32, %arg2: memref<16x32xf32, #tpu.memory_space<vmem>>, %arg3: memref<65x4xf32, #tpu.memory_space<vmem>>, %arg4: memref<16x4xf32, #tpu.memory_space<vmem>>) attributes {dimension_semantics = [#tpu.dimension_semantics<parallel>, #tpu.dimension_semantics<parallel>], iteration_bounds = array<i64: 1, 1>, scalar_prefetch = 0 : i64, scratch_operands = 0 : i64, tpu.core_type = #tpu.core_type<tc>, window_params = [{transform_indices = @transform_0, window_bounds = array<i64: 16, 32>}, {pipeline_mode = #tpu.pipeline_mode<synchronous>, transform_indices = @transform_1, window_bounds = array<i64: 65, 4>}, {transform_indices = @transform_2, window_bounds = array<i64: 16, 4>}]} {
    %c0 = arith.constant 0 : index
    %c0_0 = arith.constant 0 : index
    %0 = vector.load %arg2[%c0, %c0_0] : memref<16x32xf32, #tpu.memory_space<vmem>>, vector<16x32xf32>
    %cst = arith.constant 1.000000e+00 : f32
    %1 = vector.broadcast %cst : f32 to vector<16x1xf32>
    %2 = arith.mulf %0, %0 : vector<16x32xf32>
    %3 = tpu.concatenate %2, %0, %1 in 1 : vector<16x32xf32>, vector<16x32xf32>, vector<16x1xf32> -> vector<16x65xf32>
    %c0_1 = arith.constant 0 : index
    %c0_2 = arith.constant 0 : index
    %4 = vector.load %arg3[%c0_1, %c0_2] : memref<65x4xf32, #tpu.memory_space<vmem>>, vector<65x4xf32>
    %cst_3 = arith.constant dense<0.000000e+00> : vector<16x4xf32>
    %5 = tpu.matmul %3, %4, %cst_3 {dimension_numbers = #tpu.dot_dimension_numbers<[1], [0], [0], [1], [0, 0, 1, 1], [], []>, precision = #tpu.contract_precision<fp32>} : vector<16x65xf32>, vector<65x4xf32>, vector<16x4xf32> -> vector<16x4xf32>
    %c0_4 = arith.constant 0 : index
    %c0_5 = arith.constant 0 : index
    %6 = vector.load %arg4[%c0_4, %c0_5] : memref<16x4xf32, #tpu.memory_space<vmem>>, vector<16x4xf32>
    tpu.vector_store %arg4[%c0_4, %c0_5], %5 {strides = array<i32>} : memref<16x4xf32, #tpu.memory_space<vmem>>, vector<16x4xf32>,
    return
  }
  func.func @transform_0(%arg0: i32, %arg1: i32) -> (i32, i32) {
    %c0_i32 = arith.constant 0 : i32
    %c0_i32_0 = arith.constant 0 : i32
    return %arg0, %c0_i32 : i32, i32
  }
  func.func @transform_1(%arg0: i32, %arg1: i32) -> (i32, i32) {
    %c0_i32 = arith.constant 0 : i32
    %c0_i32_0 = arith.constant 0 : i32
    return %c0_i32, %arg1 : i32, i32
  }
  func.func @transform_2(%arg0: i32, %arg1: i32) -> (i32, i32) {
    %c0_i32 = arith.constant 0 : i32
    return %arg0, %arg1 : i32, i32
  }
}

</mosaic_0001>

<llo_original>
// kernel: tpu_custom_call.1
$region0: #{tpu_custom_call.1}
  #allocation0 [shape = 'u32[]', space=smem, size = 0x4, offset = 0x4, fixed_abs, tag = 'smem constant byte address 0x4 - core index']
  #allocation1 [shape = 'u32[144,128]{1,0:T(1,128)}', space=vmem, size = 0x12000, scoped, tag = 'internal scratch']
  %s0 = inlined_call_operand.vmem [shape: f32[16,32], index: 0, kind: input, shape index: {}]
  %s1 = inlined_call_operand.vmem [shape: f32[65,4], index: 1, kind: input, shape index: {}]
  %s2 = inlined_call_operand.vmem [shape: f32[16,4], index: 2, kind: output, shape index: {}]
  %s3 = sld [smem:[#allocation0]]
  $region18: #{tpu_custom_call.1} parent=0
    _
  %s5 = ssub.s32 1, %s3
  %s6 = scalar_select 0, %s5, %s3
  // Predicated region
  $region2: #{tpu_custom_call.1} parent=0 // pred_check
    _
  $region3: #{tpu_custom_call.1} parent=0 // pred_check_branch
    %8 = sbr.rel (0) target = $region5
  $region4: #{tpu_custom_call.1} parent=0 // pred_region
    _
  $region5: #{tpu_custom_call.1} parent=0 // pred_fallthru
    _
  // Predicated region
  $region6: #{tpu_custom_call.1} parent=0 // pred_check
    _
  $region7: #{tpu_custom_call.1} parent=0 // pred_check_branch
    %10 = sbr.rel (0) target = $region9
  $region8: #{tpu_custom_call.1} parent=0 // pred_region
    _
  $region9: #{tpu_custom_call.1} parent=0 // pred_fallthru
    _
  %v11 = vld [vmem:[%s0] sm:$0xff]
  %v12 = vld [vmem:[%s0 + $0x8] sm:$0xff]
  %v13 = vmul.f32 %v11, %v11
  %v14 = vmul.f32 %v12, %v12
  %17 = vrot.lane.b32.xlu0 %v11, 32
  %v18 = vpop.permute.xlu0 %17
  %19 = vrot.lane.b32.xlu0 %v12, 32
  %v20 = vpop.permute.xlu0 %19
  %vm23 = vcmask 261120
  %v24 = vsel %vm23, %v13, %v18
  %v25 = vsel %vm23, %v14, %v20
  %vm26 = vcmask 523264
  %v27 = vsel %vm26, %v24, 1.0
  %v28 = vsel %vm26, %v25, 1.0
  %v29 = vld [vmem:[%s1] sm:$0xff]
  %v30 = vld [vmem:[%s1 + $0x8] sm:$0xff]
  %v31 = vld [vmem:[%s1 + $0x10] sm:$0xff]
  %v32 = vld [vmem:[%s1 + $0x18] sm:$0xff]
  %v33 = vld [vmem:[%s1 + $0x20] sm:$0xff]
  %v34 = vld [vmem:[%s1 + $0x28] sm:$0xff]
  %v35 = vld [vmem:[%s1 + $0x30] sm:$0xff]
  %v36 = vld [vmem:[%s1 + $0x38] sm:$0xff]
  %v37 = vld [vmem:[%s1 + $0x40] sm:$0x1]
  %vm38 = vcmask 531456
  %v40 = vsel %vm38, %v27, 0
  %v43 = vsel %vm38, %v28, 0
  %vm45 = vcmask 1040384
  %v47 = vsel %vm45, %v37, 0
  %49 = vmatprep.subr.mxu0 0.0
  %v50 = vand.u32 %v29, 4294901760
  %51 = vmatpush1.msra.mxu0 %v50
  %52 = vmatprep.subr.mxu0 0.0
  %v53 = vand.u32 %v30, 4294901760
  %54 = vmatpush1.msra.mxu0 %v53
  %55 = vmatprep.subr.mxu0 0.0
  %v56 = vand.u32 %v31, 4294901760
  %57 = vmatpush1.msra.mxu0 %v56
  %58 = vmatprep.subr.mxu0 0.0
  %v59 = vand.u32 %v32, 4294901760
  %60 = vmatpush1.msra.mxu0 %v59
  %61 = vmatprep.subr.mxu0 0.0
  %v62 = vand.u32 %v33, 4294901760
  %63 = vmatpush1.msra.mxu0 %v62
  %64 = vmatprep.subr.mxu0 0.0
  %v65 = vand.u32 %v34, 4294901760
  %66 = vmatpush1.msra.mxu0 %v65
  %67 = vmatprep.subr.mxu0 0.0
  %v68 = vand.u32 %v35, 4294901760
  %69 = vmatpush1.msra.mxu0 %v68
  %70 = vmatprep.subr.mxu0 0.0
  %v71 = vand.u32 %v36, 4294901760
  %72 = vmatpush1.msra.mxu0 %v71
  %73 = vmatprep.subr.mxu0 0.0
  %v74 = vand.u32 %v47, 4294901760
  %75 = vmatpush1.msra.mxu0 %v74
  %76 = vmatprep.subr.mxu0 0.0
  %77 = vmatpush1.msra.mxu0 0.0
  %78 = vmatprep.subr.mxu0 0.0
  %79 = vmatpush1.msra.mxu0 0.0
  %80 = vmatprep.subr.mxu0 0.0
  %81 = vmatpush1.msra.mxu0 0.0
  %82 = vmatprep.subr.mxu0 0.0
  %83 = vmatpush1.msra.mxu0 0.0
  %84 = vmatprep.subr.mxu0 0.0
  %85 = vmatpush1.msra.mxu0 0.0
  %86 = vmatprep.subr.mxu0 0.0
  %87 = vmatpush1.msra.mxu0 0.0
  %88 = vmatprep.subr.mxu0 0.0
  %89 = vmatpush1.msra.mxu0 0.0
  %90 = vmatprep.subr.mxu0 0.0
  %91 = vmatpush1.msra.mxu0 0.0
  %92 = vmatprep.subr.mxu0 0.0
  %93 = vmatpush1.msra.mxu0 0.0
  %94 = vmatprep.subr.mxu0 0.0
  %95 = vmatpush1.msra.mxu0 0.0
  %96 = vmatprep.subr.mxu0 0.0
  %97 = vmatpush1.msra.mxu0 0.0
  %98 = vmatprep.subr.mxu0 0.0
  %99 = vmatpush1.msra.mxu0 0.0
  %100 = vmatprep.subr.mxu0 0.0
  %101 = vmatpush1.msra.mxu0 0.0
  %102 = vmatprep.subr.mxu0 0.0
  %103 = vmatpush1.msra.mxu0 0.0
  %104 = vmatprep.subr.mxu0 0.0
  %105 = vmatpush1.msra.mxu0 0.0
  %106 = vmatprep.subr.mxu0 0.0
  %107 = vmatpush1.msra.mxu0 0.0
  %108 = vmatprep.subr.mxu0 0.0
  %109 = vmatpush1.msra.mxu0 0.0
  %110 = vmatprep.subr.mxu0 0.0
  %111 = vmatpush1.msra.mxu0 0.0
  %112 = vmatprep.subr.mxu0 0.0
  %113 = vmatpush1.msra.mxu0 0.0
  %114 = vmatprep.subr.mxu0 0.0
  %115 = vmatpush1.msra.mxu0 0.0
  %116 = vmatprep.subr.mxu0 0.0
  %117 = vmatpush1.msra.mxu0 0.0
  %118 = vmatprep.subr.mxu0 0.0
  %119 = vmatpush1.msra.mxu0 0.0
  %120 = vmatprep.subr.mxu0 0.0
  %121 = vmatpush1.msra.mxu0 0.0
  %122 = vmatprep.mubr.f32.mxu0 0.0
  %v123 = vand.u32 %v40, 4294901760
  %v124 = vsub.f32 %v40, %v123
  %v125 = vand.u32 %v124, 4294901760
  %v126 = vsub.f32 %v124, %v125
  %v127 = vand.u32 %v126, 4294901760
  %128 = vmatmul.mubr.f32.gmra.mrb[0].mxu0 %v127
  %v129 = vpop.f32.mrb[0].mxu0
  %v130 = vadd.f32 0.0, %v129
  %v131 = vpop.f32.mrb[0].mxu0
  %132 = vmatprep.mubr.f32.mxu0 0.0
  %v133 = vand.u32 %v43, 4294901760
  %v134 = vsub.f32 %v43, %v133
  %v135 = vand.u32 %v134, 4294901760
  %v136 = vsub.f32 %v134, %v135
  %v137 = vand.u32 %v136, 4294901760
  %138 = vmatmul.mubr.f32.gmra.mrb[0].mxu0 %v137
  %v139 = vpop.f32.mrb[0].mxu0
  %v140 = vadd.f32 0.0, %v139
  %v141 = vpop.f32.mrb[0].mxu0
  %142 = vdwg.mxu0
  %143 = vmatprep.subr.mxu0 0.0
  %v144 = vand.u32 %v29, 4294901760
  %v145 = vsub.f32 %v29, %v144
  %v146 = vand.u32 %v145, 4294901760
  %v147 = vsub.f32 %v145, %v146
  %v148 = vand.u32 %v147, 4294901760
  %149 = vmatpush1.msra.mxu0 %v148
  %150 = vmatprep.subr.mxu0 0.0
  %v151 = vand.u32 %v30, 4294901760
  %v152 = vsub.f32 %v30, %v151
  %v153 = vand.u32 %v152, 4294901760
  %v154 = vsub.f32 %v152, %v153
  %v155 = vand.u32 %v154, 4294901760
  %156 = vmatpush1.msra.mxu0 %v155
  %157 = vmatprep.subr.mxu0 0.0
  %v158 = vand.u32 %v31, 4294901760
  %v159 = vsub.f32 %v31, %v158
  %v160 = vand.u32 %v159, 4294901760
  %v161 = vsub.f32 %v159, %v160
  %v162 = vand.u32 %v161, 4294901760
  %163 = vmatpush1.msra.mxu0 %v162
  %164 = vmatprep.subr.mxu0 0.0
  %v165 = vand.u32 %v32, 4294901760
  %v166 = vsub.f32 %v32, %v165
  %v167 = vand.u32 %v166, 4294901760
  %v168 = vsub.f32 %v166, %v167
  %v169 = vand.u32 %v168, 4294901760
  %170 = vmatpush1.msra.mxu0 %v169
  %171 = vmatprep.subr.mxu0 0.0
  %v172 = vand.u32 %v33, 4294901760
  %v173 = vsub.f32 %v33, %v172
  %v174 = vand.u32 %v173, 4294901760
  %v175 = vsub.f32 %v173, %v174
  %v176 = vand.u32 %v175, 4294901760
  %177 = vmatpush1.msra.mxu0 %v176
  %178 = vmatprep.subr.mxu0 0.0
  %v179 = vand.u32 %v34, 4294901760
  %v180 = vsub.f32 %v34, %v179
  %v181 = vand.u32 %v180, 4294901760
  %v182 = vsub.f32 %v180, %v181
  %v183 = vand.u32 %v182, 4294901760
  %184 = vmatpush1.msra.mxu0 %v183
  %185 = vmatprep.subr.mxu0 0.0
  %v186 = vand.u32 %v35, 4294901760
  %v187 = vsub.f32 %v35, %v186
  %v188 = vand.u32 %v187, 4294901760
  %v189 = vsub.f32 %v187, %v188
  %v190 = vand.u32 %v189, 4294901760
  %191 = vmatpush1.msra.mxu0 %v190
  %192 = vmatprep.subr.mxu0 0.0
  %v193 = vand.u32 %v36, 4294901760
  %v194 = vsub.f32 %v36, %v193
  %v195 = vand.u32 %v194, 4294901760
  %v196 = vsub.f32 %v194, %v195
  %v197 = vand.u32 %v196, 4294901760
  %198 = vmatpush1.msra.mxu0 %v197
  %199 = vmatprep.subr.mxu0 0.0
  %v200 = vand.u32 %v47, 4294901760
  %v201 = vsub.f32 %v47, %v200
  %v202 = vand.u32 %v201, 4294901760
  %v203 = vsub.f32 %v201, %v202
  %v204 = vand.u32 %v203, 4294901760
  %205 = vmatpush1.msra.mxu0 %v204
  %206 = vmatprep.subr.mxu0 0.0
  %207 = vmatpush1.msra.mxu0 0.0
  %208 = vmatprep.subr.mxu0 0.0
  %209 = vmatpush1.msra.mxu0 0.0
  %210 = vmatprep.subr.mxu0 0.0
  %211 = vmatpush1.msra.mxu0 0.0
  %212 = vmatprep.subr.mxu0 0.0
  %213 = vmatpush1.msra.mxu0 0.0
  %214 = vmatprep.subr.mxu0 0.0
  %215 = vmatpush1.msra.mxu0 0.0
  %216 = vmatprep.subr.mxu0 0.0
  %217 = vmatpush1.msra.mxu0 0.0
  %218 = vmatprep.subr.mxu0 0.0
  %219 = vmatpush1.msra.mxu0 0.0
  %220 = vmatprep.subr.mxu0 0.0
  %221 = vmatpush1.msra.mxu0 0.0
  %222 = vmatprep.subr.mxu0 0.0
  %223 = vmatpush1.msra.mxu0 0.0
  %224 = vmatprep.subr.mxu0 0.0
  %225 = vmatpush1.msra.mxu0 0.0
  %226 = vmatprep.subr.mxu0 0.0
  %227 = vmatpush1.msra.mxu0 0.0
  %228 = vmatprep.subr.mxu0 0.0
  %229 = vmatpush1.msra.mxu0 0.0
  %230 = vmatprep.subr.mxu0 0.0
  %231 = vmatpush1.msra.mxu0 0.0
  %232 = vmatprep.subr.mxu0 0.0
  %233 = vmatpush1.msra.mxu0 0.0
  %234 = vmatprep.subr.mxu0 0.0
  %235 = vmatpush1.msra.mxu0 0.0
  %236 = vmatprep.subr.mxu0 0.0
  %237 = vmatpush1.msra.mxu0 0.0
  %238 = vmatprep.subr.mxu0 0.0
  %239 = vmatpush1.msra.mxu0 0.0
  %240 = vmatprep.subr.mxu0 0.0
  %241 = vmatpush1.msra.mxu0 0.0
  %242 = vmatprep.subr.mxu0 0.0
  %243 = vmatpush1.msra.mxu0 0.0
  %244 = vmatprep.subr.mxu0 0.0
  %245 = vmatpush1.msra.mxu0 0.0
  %246 = vmatprep.subr.mxu0 0.0
  %247 = vmatpush1.msra.mxu0 0.0
  %248 = vmatprep.subr.mxu0 0.0
  %249 = vmatpush1.msra.mxu0 0.0
  %250 = vmatprep.subr.mxu0 0.0
  %251 = vmatpush1.msra.mxu0 0.0
  %252 = vmatprep.mubr.f32.mxu0 0.0
  %v253 = vand.u32 %v40, 4294901760
  %254 = vmatmul.mubr.f32.gmra.mrb[0].mxu0 %v253
  %v255 = vpop.f32.mrb[0].mxu0
  %v256 = vadd.f32 %v130, %v255
  %v257 = vpop.f32.mrb[0].mxu0
  %258 = vmatprep.mubr.f32.mxu0 0.0
  %v259 = vand.u32 %v43, 4294901760
  %260 = vmatmul.mubr.f32.gmra.mrb[0].mxu0 %v259
  %v261 = vpop.f32.mrb[0].mxu0
  %v262 = vadd.f32 %v140, %v261
  %v263 = vpop.f32.mrb[0].mxu0
  %264 = vdwg.mxu0
  %265 = vmatprep.subr.mxu0 0.0
  %v266 = vand.u32 %v29, 4294901760
  %v267 = vsub.f32 %v29, %v266
  %268 = vmatpush1.msra.mxu0 %v267
  %269 = vmatprep.subr.mxu0 0.0
  %v270 = vand.u32 %v30, 4294901760
  %v271 = vsub.f32 %v30, %v270
  %272 = vmatpush1.msra.mxu0 %v271
  %273 = vmatprep.subr.mxu0 0.0
  %v274 = vand.u32 %v31, 4294901760
  %v275 = vsub.f32 %v31, %v274
  %276 = vmatpush1.msra.mxu0 %v275
  %277 = vmatprep.subr.mxu0 0.0
  %v278 = vand.u32 %v32, 4294901760
  %v279 = vsub.f32 %v32, %v278
  %280 = vmatpush1.msra.mxu0 %v279
  %281 = vmatprep.subr.mxu0 0.0
  %v282 = vand.u32 %v33, 4294901760
  %v283 = vsub.f32 %v33, %v282
  %284 = vmatpush1.msra.mxu0 %v283
  %285 = vmatprep.subr.mxu0 0.0
  %v286 = vand.u32 %v34, 4294901760
  %v287 = vsub.f32 %v34, %v286
  %288 = vmatpush1.msra.mxu0 %v287
  %289 = vmatprep.subr.mxu0 0.0
  %v290 = vand.u32 %v35, 4294901760
  %v291 = vsub.f32 %v35, %v290
  %292 = vmatpush1.msra.mxu0 %v291
  %293 = vmatprep.subr.mxu0 0.0
  %v294 = vand.u32 %v36, 4294901760
  %v295 = vsub.f32 %v36, %v294
  %296 = vmatpush1.msra.mxu0 %v295
  %297 = vmatprep.subr.mxu0 0.0
  %v298 = vand.u32 %v47, 4294901760
  %v299 = vsub.f32 %v47, %v298
  %300 = vmatpush1.msra.mxu0 %v299
  %301 = vmatprep.subr.mxu0 0.0
  %302 = vmatpush1.msra.mxu0 0.0
  %303 = vmatprep.subr.mxu0 0.0
  %304 = vmatpush1.msra.mxu0 0.0
  %305 = vmatprep.subr.mxu0 0.0
  %306 = vmatpush1.msra.mxu0 0.0
  %307 = vmatprep.subr.mxu0 0.0
  %308 = vmatpush1.msra.mxu0 0.0
  %309 = vmatprep.subr.mxu0 0.0
  %310 = vmatpush1.msra.mxu0 0.0
  %311 = vmatprep.subr.mxu0 0.0
  %312 = vmatpush1.msra.mxu0 0.0
  %313 = vmatprep.subr.mxu0 0.0
  %314 = vmatpush1.msra.mxu0 0.0
  %315 = vmatprep.subr.mxu0 0.0
  %316 = vmatpush1.msra.mxu0 0.0
  %317 = vmatprep.subr.mxu0 0.0
  %318 = vmatpush1.msra.mxu0 0.0
  %319 = vmatprep.subr.mxu0 0.0
  %320 = vmatpush1.msra.mxu0 0.0
  %321 = vmatprep.subr.mxu0 0.0
  %322 = vmatpush1.msra.mxu0 0.0
  %323 = vmatprep.subr.mxu0 0.0
  %324 = vmatpush1.msra.mxu0 0.0
  %325 = vmatprep.subr.mxu0 0.0
  %326 = vmatpush1.msra.mxu0 0.0
  %327 = vmatprep.subr.mxu0 0.0
  %328 = vmatpush1.msra.mxu0 0.0
  %329 = vmatprep.subr.mxu0 0.0
  %330 = vmatpush1.msra.mxu0 0.0
  %331 = vmatprep.subr.mxu0 0.0
  %332 = vmatpush1.msra.mxu0 0.0
  %333 = vmatprep.subr.mxu0 0.0
  %334 = vmatpush1.msra.mxu0 0.0
  %335 = vmatprep.subr.mxu0 0.0
  %336 = vmatpush1.msra.mxu0 0.0
  %337 = vmatprep.subr.mxu0 0.0
  %338 = vmatpush1.msra.mxu0 0.0
  %339 = vmatprep.subr.mxu0 0.0
  %340 = vmatpush1.msra.mxu0 0.0
  %341 = vmatprep.subr.mxu0 0.0
  %342 = vmatpush1.msra.mxu0 0.0
  %343 = vmatprep.subr.mxu0 0.0
  %344 = vmatpush1.msra.mxu0 0.0
  %345 = vmatprep.subr.mxu0 0.0
  %346 = vmatpush1.msra.mxu0 0.0
  %347 = vmatprep.mubr.f32.mxu0 0.0
  %v348 = vand.u32 %v40, 4294901760
  %v349 = vsub.f32 %v40, %v348
  %350 = vmatmul.mubr.f32.gmra.mrb[0].mxu0 %v349
  %v351 = vpop.f32.mrb[0].mxu0
  %v352 = vadd.f32 %v256, %v351
  %v353 = vpop.f32.mrb[0].mxu0
  %354 = vmatprep.mubr.f32.mxu0 0.0
  %v355 = vand.u32 %v43, 4294901760
  %v356 = vsub.f32 %v43, %v355
  %357 = vmatmul.mubr.f32.gmra.mrb[0].mxu0 %v356
  %v358 = vpop.f32.mrb[0].mxu0
  %v359 = vadd.f32 %v262, %v358
  %v360 = vpop.f32.mrb[0].mxu0
  %361 = vdwg.mxu0
  %362 = vmatprep.subr.mxu0 0.0
  %v363 = vand.u32 %v29, 4294901760
  %364 = vmatpush1.msra.mxu0 %v363
  %365 = vmatprep.subr.mxu0 0.0
  %v366 = vand.u32 %v30, 4294901760
  %367 = vmatpush1.msra.mxu0 %v366
  %368 = vmatprep.subr.mxu0 0.0
  %v369 = vand.u32 %v31, 4294901760
  %370 = vmatpush1.msra.mxu0 %v369
  %371 = vmatprep.subr.mxu0 0.0
  %v372 = vand.u32 %v32, 4294901760
  %373 = vmatpush1.msra.mxu0 %v372
  %374 = vmatprep.subr.mxu0 0.0
  %v375 = vand.u32 %v33, 4294901760
  %376 = vmatpush1.msra.mxu0 %v375
  %377 = vmatprep.subr.mxu0 0.0
  %v378 = vand.u32 %v34, 4294901760
  %379 = vmatpush1.msra.mxu0 %v378
  %380 = vmatprep.subr.mxu0 0.0
  %v381 = vand.u32 %v35, 4294901760
  %382 = vmatpush1.msra.mxu0 %v381
  %383 = vmatprep.subr.mxu0 0.0
  %v384 = vand.u32 %v36, 4294901760
  %385 = vmatpush1.msra.mxu0 %v384
  %386 = vmatprep.subr.mxu0 0.0
  %v387 = vand.u32 %v47, 4294901760
  %388 = vmatpush1.msra.mxu0 %v387
  %389 = vmatprep.subr.mxu0 0.0
  %390 = vmatpush1.msra.mxu0 0.0
  %391 = vmatprep.subr.mxu0 0.0
  %392 = vmatpush1.msra.mxu0 0.0
  %393 = vmatprep.subr.mxu0 0.0
  %394 = vmatpush1.msra.mxu0 0.0
  %395 = vmatprep.subr.mxu0 0.0
  %396 = vmatpush1.msra.mxu0 0.0
  %397 = vmatprep.subr.mxu0 0.0
  %398 = vmatpush1.msra.mxu0 0.0
  %399 = vmatprep.subr.mxu0 0.0
  %400 = vmatpush1.msra.mxu0 0.0
  %401 = vmatprep.subr.mxu0 0.0
  %402 = vmatpush1.msra.mxu0 0.0
  %403 = vmatprep.subr.mxu0 0.0
  %404 = vmatpush1.msra.mxu0 0.0
  %405 = vmatprep.subr.mxu0 0.0
  %406 = vmatpush1.msra.mxu0 0.0
  %407 = vmatprep.subr.mxu0 0.0
  %408 = vmatpush1.msra.mxu0 0.0
  %409 = vmatprep.subr.mxu0 0.0
  %410 = vmatpush1.msra.mxu0 0.0
  %411 = vmatprep.subr.mxu0 0.0
  %412 = vmatpush1.msra.mxu0 0.0
  %413 = vmatprep.subr.mxu0 0.0
  %414 = vmatpush1.msra.mxu0 0.0
  %415 = vmatprep.subr.mxu0 0.0
  %416 = vmatpush1.msra.mxu0 0.0
  %417 = vmatprep.subr.mxu0 0.0
  %418 = vmatpush1.msra.mxu0 0.0
  %419 = vmatprep.subr.mxu0 0.0
  %420 = vmatpush1.msra.mxu0 0.0
  %421 = vmatprep.subr.mxu0 0.0
  %422 = vmatpush1.msra.mxu0 0.0
  %423 = vmatprep.subr.mxu0 0.0
  %424 = vmatpush1.msra.mxu0 0.0
  %425 = vmatprep.subr.mxu0 0.0
  %426 = vmatpush1.msra.mxu0 0.0
  %427 = vmatprep.subr.mxu0 0.0
  %428 = vmatpush1.msra.mxu0 0.0
  %429 = vmatprep.subr.mxu0 0.0
  %430 = vmatpush1.msra.mxu0 0.0
  %431 = vmatprep.subr.mxu0 0.0
  %432 = vmatpush1.msra.mxu0 0.0
  %433 = vmatprep.subr.mxu0 0.0
  %434 = vmatpush1.msra.mxu0 0.0
  %435 = vmatprep.mubr.f32.mxu0 0.0
  %v436 = vand.u32 %v40, 4294901760
  %v437 = vsub.f32 %v40, %v436
  %v438 = vand.u32 %v437, 4294901760
  %439 = vmatmul.mubr.f32.gmra.mrb[0].mxu0 %v438
  %v440 = vpop.f32.mrb[0].mxu0
  %v441 = vadd.f32 %v352, %v440
  %v442 = vpop.f32.mrb[0].mxu0
  %443 = vmatprep.mubr.f32.mxu0 0.0
  %v444 = vand.u32 %v43, 4294901760
  %v445 = vsub.f32 %v43, %v444
  %v446 = vand.u32 %v445, 4294901760
  %447 = vmatmul.mubr.f32.gmra.mrb[0].mxu0 %v446
  %v448 = vpop.f32.mrb[0].mxu0
  %v449 = vadd.f32 %v359, %v448
  %v450 = vpop.f32.mrb[0].mxu0
  %451 = vdwg.mxu0
  %452 = vmatprep.subr.mxu0 0.0
  %v453 = vand.u32 %v29, 4294901760
  %v454 = vsub.f32 %v29, %v453
  %v455 = vand.u32 %v454, 4294901760
  %456 = vmatpush1.msra.mxu0 %v455
  %457 = vmatprep.subr.mxu0 0.0
  %v458 = vand.u32 %v30, 4294901760
  %v459 = vsub.f32 %v30, %v458
  %v460 = vand.u32 %v459, 4294901760
  %461 = vmatpush1.msra.mxu0 %v460
  %462 = vmatprep.subr.mxu0 0.0
  %v463 = vand.u32 %v31, 4294901760
  %v464 = vsub.f32 %v31, %v463
  %v465 = vand.u32 %v464, 4294901760
  %466 = vmatpush1.msra.mxu0 %v465
  %467 = vmatprep.subr.mxu0 0.0
  %v468 = vand.u32 %v32, 4294901760
  %v469 = vsub.f32 %v32, %v468
  %v470 = vand.u32 %v469, 4294901760
  %471 = vmatpush1.msra.mxu0 %v470
  %472 = vmatprep.subr.mxu0 0.0
  %v473 = vand.u32 %v33, 4294901760
  %v474 = vsub.f32 %v33, %v473
  %v475 = vand.u32 %v474, 4294901760
  %476 = vmatpush1.msra.mxu0 %v475
  %477 = vmatprep.subr.mxu0 0.0
  %v478 = vand.u32 %v34, 4294901760
  %v479 = vsub.f32 %v34, %v478
  %v480 = vand.u32 %v479, 4294901760
  %481 = vmatpush1.msra.mxu0 %v480
  %482 = vmatprep.subr.mxu0 0.0
  %v483 = vand.u32 %v35, 4294901760
  %v484 = vsub.f32 %v35, %v483
  %v485 = vand.u32 %v484, 4294901760
  %486 = vmatpush1.msra.mxu0 %v485
  %487 = vmatprep.subr.mxu0 0.0
  %v488 = vand.u32 %v36, 4294901760
  %v489 = vsub.f32 %v36, %v488
  %v490 = vand.u32 %v489, 4294901760
  %491 = vmatpush1.msra.mxu0 %v490
  %492 = vmatprep.subr.mxu0 0.0
  %v493 = vand.u32 %v47, 4294901760
  %v494 = vsub.f32 %v47, %v493
  %v495 = vand.u32 %v494, 4294901760
  %496 = vmatpush1.msra.mxu0 %v495
  %497 = vmatprep.subr.mxu0 0.0
  %498 = vmatpush1.msra.mxu0 0.0
  %499 = vmatprep.subr.mxu0 0.0
  %500 = vmatpush1.msra.mxu0 0.0
  %501 = vmatprep.subr.mxu0 0.0
  %502 = vmatpush1.msra.mxu0 0.0
  %503 = vmatprep.subr.mxu0 0.0
  %504 = vmatpush1.msra.mxu0 0.0
  %505 = vmatprep.subr.mxu0 0.0
  %506 = vmatpush1.msra.mxu0 0.0
  %507 = vmatprep.subr.mxu0 0.0
  %508 = vmatpush1.msra.mxu0 0.0
  %509 = vmatprep.subr.mxu0 0.0
  %510 = vmatpush1.msra.mxu0 0.0
  %511 = vmatprep.subr.mxu0 0.0
  %512 = vmatpush1.msra.mxu0 0.0
  %513 = vmatprep.subr.mxu0 0.0
  %514 = vmatpush1.msra.mxu0 0.0
  %515 = vmatprep.subr.mxu0 0.0
  %516 = vmatpush1.msra.mxu0 0.0
  %517 = vmatprep.subr.mxu0 0.0
  %518 = vmatpush1.msra.mxu0 0.0
  %519 = vmatprep.subr.mxu0 0.0
  %520 = vmatpush1.msra.mxu0 0.0
  %521 = vmatprep.subr.mxu0 0.0
  %522 = vmatpush1.msra.mxu0 0.0
  %523 = vmatprep.subr.mxu0 0.0
  %524 = vmatpush1.msra.mxu0 0.0
  %525 = vmatprep.subr.mxu0 0.0
  %526 = vmatpush1.msra.mxu0 0.0
  %527 = vmatprep.subr.mxu0 0.0
  %528 = vmatpush1.msra.mxu0 0.0
  %529 = vmatprep.subr.mxu0 0.0
  %530 = vmatpush1.msra.mxu0 0.0
  %531 = vmatprep.subr.mxu0 0.0
  %532 = vmatpush1.msra.mxu0 0.0
  %533 = vmatprep.subr.mxu0 0.0
  %534 = vmatpush1.msra.mxu0 0.0
  %535 = vmatprep.subr.mxu0 0.0
  %536 = vmatpush1.msra.mxu0 0.0
  %537 = vmatprep.subr.mxu0 0.0
  %538 = vmatpush1.msra.mxu0 0.0
  %539 = vmatprep.subr.mxu0 0.0
  %540 = vmatpush1.msra.mxu0 0.0
  %541 = vmatprep.subr.mxu0 0.0
  %542 = vmatpush1.msra.mxu0 0.0
  %543 = vmatprep.mubr.f32.mxu0 0.0
  %v544 = vand.u32 %v40, 4294901760
  %545 = vmatmul.mubr.f32.gmra.mrb[0].mxu0 %v544
  %v546 = vpop.f32.mrb[0].mxu0
  %v547 = vadd.f32 %v441, %v546
  %v548 = vpop.f32.mrb[0].mxu0
  %549 = vmatprep.mubr.f32.mxu0 0.0
  %v550 = vand.u32 %v43, 4294901760
  %551 = vmatmul.mubr.f32.gmra.mrb[0].mxu0 %v550
  %v552 = vpop.f32.mrb[0].mxu0
  %v553 = vadd.f32 %v449, %v552
  %v554 = vpop.f32.mrb[0].mxu0
  %555 = vdwg.mxu0
  %556 = vmatprep.subr.mxu0 0.0
  %v557 = vand.u32 %v29, 4294901760
  %558 = vmatpush1.msra.mxu0 %v557
  %559 = vmatprep.subr.mxu0 0.0
  %v560 = vand.u32 %v30, 4294901760
  %561 = vmatpush1.msra.mxu0 %v560
  %562 = vmatprep.subr.mxu0 0.0
  %v563 = vand.u32 %v31, 4294901760
  %564 = vmatpush1.msra.mxu0 %v563
  %565 = vmatprep.subr.mxu0 0.0
  %v566 = vand.u32 %v32, 4294901760
  %567 = vmatpush1.msra.mxu0 %v566
  %568 = vmatprep.subr.mxu0 0.0
  %v569 = vand.u32 %v33, 4294901760
  %570 = vmatpush1.msra.mxu0 %v569
  %571 = vmatprep.subr.mxu0 0.0
  %v572 = vand.u32 %v34, 4294901760
  %573 = vmatpush1.msra.mxu0 %v572
  %574 = vmatprep.subr.mxu0 0.0
  %v575 = vand.u32 %v35, 4294901760
  %576 = vmatpush1.msra.mxu0 %v575
  %577 = vmatprep.subr.mxu0 0.0
  %v578 = vand.u32 %v36, 4294901760
  %579 = vmatpush1.msra.mxu0 %v578
  %580 = vmatprep.subr.mxu0 0.0
  %v581 = vand.u32 %v47, 4294901760
  %582 = vmatpush1.msra.mxu0 %v581
  %583 = vmatprep.subr.mxu0 0.0
  %584 = vmatpush1.msra.mxu0 0.0
  %585 = vmatprep.subr.mxu0 0.0
  %586 = vmatpush1.msra.mxu0 0.0
  %587 = vmatprep.subr.mxu0 0.0
  %588 = vmatpush1.msra.mxu0 0.0
  %589 = vmatprep.subr.mxu0 0.0
  %590 = vmatpush1.msra.mxu0 0.0
  %591 = vmatprep.subr.mxu0 0.0
  %592 = vmatpush1.msra.mxu0 0.0
  %593 = vmatprep.subr.mxu0 0.0
  %594 = vmatpush1.msra.mxu0 0.0
  %595 = vmatprep.subr.mxu0 0.0
  %596 = vmatpush1.msra.mxu0 0.0
  %597 = vmatprep.subr.mxu0 0.0
  %598 = vmatpush1.msra.mxu0 0.0
  %599 = vmatprep.subr.mxu0 0.0
  %600 = vmatpush1.msra.mxu0 0.0
  %601 = vmatprep.subr.mxu0 0.0
  %602 = vmatpush1.msra.mxu0 0.0
  %603 = vmatprep.subr.mxu0 0.0
  %604 = vmatpush1.msra.mxu0 0.0
  %605 = vmatprep.subr.mxu0 0.0
  %606 = vmatpush1.msra.mxu0 0.0
  %607 = vmatprep.subr.mxu0 0.0
  %608 = vmatpush1.msra.mxu0 0.0
  %609 = vmatprep.subr.mxu0 0.0
  %610 = vmatpush1.msra.mxu0 0.0
  %611 = vmatprep.subr.mxu0 0.0
  %612 = vmatpush1.msra.mxu0 0.0
  %613 = vmatprep.subr.mxu0 0.0
  %614 = vmatpush1.msra.mxu0 0.0
  %615 = vmatprep.subr.mxu0 0.0
  %616 = vmatpush1.msra.mxu0 0.0
  %617 = vmatprep.subr.mxu0 0.0
  %618 = vmatpush1.msra.mxu0 0.0
  %619 = vmatprep.subr.mxu0 0.0
  %620 = vmatpush1.msra.mxu0 0.0
  %621 = vmatprep.subr.mxu0 0.0
  %622 = vmatpush1.msra.mxu0 0.0
  %623 = vmatprep.subr.mxu0 0.0
  %624 = vmatpush1.msra.mxu0 0.0
  %625 = vmatprep.subr.mxu0 0.0
  %626 = vmatpush1.msra.mxu0 0.0
  %627 = vmatprep.subr.mxu0 0.0
  %628 = vmatpush1.msra.mxu0 0.0
  %629 = vmatprep.mubr.f32.mxu0 0.0
  %v630 = vand.u32 %v40, 4294901760
  %631 = vmatmul.mubr.f32.gmra.mrb[0].mxu0 %v630
  %v632 = vpop.f32.mrb[0].mxu0
  %v633 = vadd.f32 %v547, %v632
  %v634 = vpop.f32.mrb[0].mxu0
  %635 = vmatprep.mubr.f32.mxu0 0.0
  %v636 = vand.u32 %v43, 4294901760
  %637 = vmatmul.mubr.f32.gmra.mrb[0].mxu0 %v636
  %v638 = vpop.f32.mrb[0].mxu0
  %v639 = vadd.f32 %v553, %v638
  %v640 = vpop.f32.mrb[0].mxu0
  %641 = vdwg.mxu0
  %vm642 = vcmask 31744
  %643 = vst.msk [vmem:[%s2] sm:$0xff] %vm642, %v633
  %644 = vst.msk [vmem:[%s2 + $0x8] sm:$0xff] %vm642, %v639
  // Predicated region
  $region10: #{tpu_custom_call.1} parent=0 // pred_check
    _
  $region11: #{tpu_custom_call.1} parent=0 // pred_check_branch
    %646 = sbr.rel (0) target = $region13
  $region12: #{tpu_custom_call.1} parent=0 // pred_region
    _
  $region13: #{tpu_custom_call.1} parent=0 // pred_fallthru
    _
  // Predicated region
  $region14: #{tpu_custom_call.1} parent=0 // pred_check
    _
  $region15: #{tpu_custom_call.1} parent=0 // pred_check_branch
    %648 = sbr.rel (0) target = $region17
  $region16: #{tpu_custom_call.1} parent=0 // pred_region
    _
  $region17: #{tpu_custom_call.1} parent=0 // pred_fallthru
    _

</llo_original>
